<compile_context>
chip_gen: v7x
topology: tpu7x:2x2x1
jax: 0.10.0
libtpu: 0.0.40
codegen_flags: <defaults>
</compile_context>

<pallas_src>
import functools

import jax
import jax.numpy as jnp
from jax.experimental import pallas as pl
from jax.experimental.pallas import tpu as pltpu

INPUT_DIM = 2
OUTPUT_DIM = 2
HIDDEN1, HIDDEN2, HIDDEN3 = 256, 128, 64


def _generator_kernel(x_ref, w1_ref, b1_ref, w2_ref, b2_ref, w34t_ref, b34_ref,
                      o_ref):
    """fc1(VPU) -> ReLU -> fc2(MXU) -> ReLU -> merged fc3/fc4 (VPU mul + XLU reduce)."""
    x = x_ref[...]

    # fc1 + ReLU: K=2 would leave the MXU ~1% utilized, so two broadcast FMAs
    # on the VPU (VALU slot has slack, frees the MXU slot for fc2).
    h = (x[:, 0:1] * w1_ref[0:1, :]
         + x[:, 1:2] * w1_ref[1:2, :]
         + b1_ref[...])
    h = jnp.maximum(h, 0.0)

    # fc2 + ReLU on the MXU. w2 is pre-cast in the wrapper (bf16 by default);
    # only the activations are cast here. Accumulate in f32.
    h2 = jnp.dot(h.astype(w2_ref.dtype), w2_ref[...],
                 preferred_element_type=jnp.float32)
    h2 = jnp.maximum(h2 + b2_ref[...], 0.0)

    # Merged fc3/fc4 (no activation between them). A (TB,128)@(128,2) MXU pass
    # costs as many vmatmul pushes as fc2 for 1/64 of the useful FLOPs, so do the
    # two output columns as VPU multiplies + XLU lane reductions instead.
    cols = [jnp.sum(h2 * w34t_ref[j:j + 1, :], axis=-1, keepdims=True)
            for j in range(OUTPUT_DIM)]
    out = jnp.concatenate(cols, axis=-1) + b34_ref[...]
    o_ref[...] = out.astype(o_ref.dtype)


def prepare_params(params, *, use_bf16=True):
    """One-time prep (do this at init, not per call): merge fc3/fc4 and pre-cast
    the MXU weight. Returns the dict consumed by generator_forward."""
    w34 = params["w3"] @ params["w4"]                  # (HIDDEN2, OUTPUT_DIM)
    b34 = params["b3"] @ params["w4"] + params["b4"]   # (1, OUTPUT_DIM)
    w2 = params["w2"].astype(jnp.bfloat16) if use_bf16 else params["w2"]
    return {
        "w1": params["w1"], "b1": params["b1"],
        "w2": w2, "b2": params["b2"],
        "w34t": jnp.asarray(w34).T,                    # (OUTPUT_DIM, HIDDEN2): lane-aligned rows
        "b34": b34,
    }


def _pick_batch_tile(batch, batch_tile):
    """Multiple-of-8 tile, >= 2 grid steps when the batch allows (so v7x's two
    TensorCores both get work), chosen so the padded batch divides evenly
    (no mostly-padding tail tile)."""
    b8 = ((batch + 7) // 8) * 8
    if b8 <= 16:
        return b8
    n_steps = max(2, pl.cdiv(b8, batch_tile))
    tb = ((pl.cdiv(b8, n_steps) + 7) // 8) * 8
    return min(tb, batch_tile)


@functools.partial(jax.jit, static_argnames=("batch_tile",))
def generator_forward(x, prepped, batch_tile=2048):
    """x: (B, INPUT_DIM) float32. prepped: output of prepare_params."""
    B = x.shape[0]
    w1, b1 = prepped["w1"], prepped["b1"]
    w2, b2 = prepped["w2"], prepped["b2"]
    w34t, b34 = prepped["w34t"], prepped["b34"]

    tb = _pick_batch_tile(B, batch_tile)
    b_pad = pl.cdiv(B, tb) * tb
    if b_pad != B:
        x = jnp.pad(x, ((0, b_pad - B), (0, 0)))
    grid = (b_pad // tb,)

    def resident(a):
        # Same block index every grid step -> DMA'd once, stays resident in VMEM.
        return pl.BlockSpec(a.shape, lambda i: (0, 0))

    flops = 2 * b_pad * (INPUT_DIM * HIDDEN1 + HIDDEN1 * HIDDEN2
                         + HIDDEN2 * OUTPUT_DIM)
    weights = (w1, b1, w2, b2, w34t, b34)
    bytes_accessed = (b_pad * (INPUT_DIM + OUTPUT_DIM) * 4
                      + sum(int(a.size) * a.dtype.itemsize for a in weights))

    out = pl.pallas_call(
        _generator_kernel,
        out_shape=jax.ShapeDtypeStruct((b_pad, OUTPUT_DIM), jnp.float32),
        grid=grid,
        in_specs=[
            pl.BlockSpec((tb, INPUT_DIM), lambda i: (i, 0)),
            resident(w1), resident(b1),
            resident(w2), resident(b2),
            resident(w34t), resident(b34),
        ],
        out_specs=pl.BlockSpec((tb, OUTPUT_DIM), lambda i: (i, 0)),
        compiler_params=pltpu.CompilerParams(
            dimension_semantics=("parallel",),
            vmem_limit_bytes=48 * 1024 * 1024),
        cost_estimate=pl.CostEstimate(flops=flops, transcendentals=0,
                                      bytes_accessed=bytes_accessed),
    )(x, w1, b1, w2, b2, w34t, b34)

    return out[:B]


def init_params(key):
    """Deterministic init mirroring nn.Linear default (uniform +/- 1/sqrt(fan_in)),
    but stored as (in_features, out_features)."""
    dims = [(INPUT_DIM, HIDDEN1), (HIDDEN1, HIDDEN2),
            (HIDDEN2, HIDDEN3), (HIDDEN3, OUTPUT_DIM)]
    params = {}
    for idx, (fan_in, fan_out) in enumerate(dims, start=1):
        key, kw, kb = jax.random.split(key, 3)
        bound = 1.0 / jnp.sqrt(float(fan_in))
        params[f"w{idx}"] = jax.random.uniform(kw, (fan_in, fan_out), jnp.float32,
                                               minval=-bound, maxval=bound)
        params[f"b{idx}"] = jax.random.uniform(kb, (1, fan_out), jnp.float32,
                                               minval=-bound, maxval=bound)
    return params


def reference_forward(x, params):
    h = jnp.maximum(x @ params["w1"] + params["b1"], 0.0)
    h = jnp.maximum(h @ params["w2"] + params["b2"], 0.0)
    h = h @ params["w3"] + params["b3"]
    return h @ params["w4"] + params["b4"]


if __name__ == "__main__":
    key = jax.random.PRNGKey(0)
    key, kx1, kx2 = jax.random.split(key, 3)
    params = init_params(key)

    # Small case (single tile), exact-f32 path, tight tolerance.
    prepped_f32 = prepare_params(params, use_bf16=False)
    B = 8
    x = jax.random.normal(kx1, (B, INPUT_DIM), dtype=jnp.float32)
    out = jax.block_until_ready(generator_forward(x, prepped_f32))
    ref = reference_forward(x, params)
    assert out.shape == (B, OUTPUT_DIM)
    assert jnp.allclose(out, ref, atol=1e-4, rtol=1e-4)

    # Larger non-tile-aligned batch: exercises multi-step grid (>=2 parallel
    # steps for v7x), tail padding, and the default bf16-MXU path (tolerance
    # relaxed accordingly; f32 accumulation keeps error ~1e-3 relative).
    prepped = prepare_params(params, use_bf16=True)
    B2 = 1030
    x2 = jax.random.normal(kx2, (B2, INPUT_DIM), dtype=jnp.float32)
    out2 = jax.block_until_ready(generator_forward(x2, prepped))
    ref2 = reference_forward(x2, params)
    assert out2.shape == (B2, OUTPUT_DIM)
    assert jnp.allclose(out2, ref2, atol=3e-2, rtol=3e-2)

    print("KERNEL_OK")
</pallas_src>

<mosaic_0001>
module attributes {stable_mosaic.version = 11 : i64} {
  func.func @_generator_kernel(%arg0: i32, %arg1: memref<8x2xf32, #tpu.memory_space<vmem>>, %arg2: memref<2x256xf32, #tpu.memory_space<vmem>>, %arg3: memref<1x256xf32, #tpu.memory_space<vmem>>, %arg4: memref<256x128xf32, #tpu.memory_space<vmem>>, %arg5: memref<1x128xf32, #tpu.memory_space<vmem>>, %arg6: memref<2x128xf32, #tpu.memory_space<vmem>>, %arg7: memref<1x2xf32, #tpu.memory_space<vmem>>, %arg8: memref<8x2xf32, #tpu.memory_space<vmem>>) attributes {dimension_semantics = [#tpu.dimension_semantics<parallel>], iteration_bounds = array<i64: 1>, scalar_prefetch = 0 : i64, scratch_operands = 0 : i64, tpu.core_type = #tpu.core_type<tc>, window_params = [{transform_indices = @transform_0, window_bounds = array<i64: 8, 2>}, {pipeline_mode = #tpu.pipeline_mode<synchronous>, transform_indices = @transform_1, window_bounds = array<i64: 2, 256>}, {pipeline_mode = #tpu.pipeline_mode<synchronous>, transform_indices = @transform_2, window_bounds = array<i64: 1, 256>}, {pipeline_mode = #tpu.pipeline_mode<synchronous>, transform_indices = @transform_3, window_bounds = array<i64: 256, 128>}, {pipeline_mode = #tpu.pipeline_mode<synchronous>, transform_indices = @transform_4, window_bounds = array<i64: 1, 128>}, {pipeline_mode = #tpu.pipeline_mode<synchronous>, transform_indices = @transform_5, window_bounds = array<i64: 2, 128>}, {pipeline_mode = #tpu.pipeline_mode<synchronous>, transform_indices = @transform_6, window_bounds = array<i64: 1, 2>}, {transform_indices = @transform_7, window_bounds = array<i64: 8, 2>}]} {
    %c0 = arith.constant 0 : index
    %c0_0 = arith.constant 0 : index
    %0 = vector.load %arg1[%c0, %c0_0] : memref<8x2xf32, #tpu.memory_space<vmem>>, vector<8x2xf32>
    %1 = vector.extract_strided_slice %0 {offsets = [0, 0], sizes = [8, 1], strides = [1, 1]} : vector<8x2xf32> to vector<8x1xf32>
    %c0_1 = arith.constant 0 : index
    %c0_2 = arith.constant 0 : index
    %2 = vector.load %arg2[%c0_1, %c0_2] : memref<2x256xf32, #tpu.memory_space<vmem>>, vector<1x256xf32>
    %3 = vector.broadcast %1 : vector<8x1xf32> to vector<8x256xf32>
    %4 = vector.broadcast %2 : vector<1x256xf32> to vector<8x256xf32>
    %5 = arith.mulf %3, %4 : vector<8x256xf32>
    %6 = vector.extract_strided_slice %0 {offsets = [0, 1], sizes = [8, 1], strides = [1, 1]} : vector<8x2xf32> to vector<8x1xf32>
    %c1 = arith.constant 1 : index
    %c0_3 = arith.constant 0 : index
    %7 = vector.load %arg2[%c1, %c0_3] : memref<2x256xf32, #tpu.memory_space<vmem>>, vector<1x256xf32>
    %8 = vector.broadcast %6 : vector<8x1xf32> to vector<8x256xf32>
    %9 = vector.broadcast %7 : vector<1x256xf32> to vector<8x256xf32>
    %10 = arith.mulf %8, %9 : vector<8x256xf32>
    %11 = arith.addf %5, %10 : vector<8x256xf32>
    %c0_4 = arith.constant 0 : index
    %c0_5 = arith.constant 0 : index
    %12 = vector.load %arg3[%c0_4, %c0_5] : memref<1x256xf32, #tpu.memory_space<vmem>>, vector<1x256xf32>
    %13 = vector.broadcast %12 : vector<1x256xf32> to vector<8x256xf32>
    %14 = arith.addf %11, %13 : vector<8x256xf32>
    %cst = arith.constant 0.000000e+00 : f32
    %15 = vector.broadcast %cst : f32 to vector<8x256xf32>
    %16 = arith.maximumf %14, %15 : vector<8x256xf32>
    %c0_6 = arith.constant 0 : index
    %c0_7 = arith.constant 0 : index
    %17 = vector.load %arg4[%c0_6, %c0_7] : memref<256x128xf32, #tpu.memory_space<vmem>>, vector<256x128xf32>
    %cst_8 = arith.constant dense<0.000000e+00> : vector<8x128xf32>
    %18 = tpu.matmul %16, %17, %cst_8 {dimension_numbers = #tpu.dot_dimension_numbers<[1], [0], [0], [1], [0, 0, 1, 1], [], []>} : vector<8x256xf32>, vector<256x128xf32>, vector<8x128xf32> -> vector<8x128xf32>
    %c0_9 = arith.constant 0 : index
    %c0_10 = arith.constant 0 : index
    %19 = vector.load %arg5[%c0_9, %c0_10] : memref<1x128xf32, #tpu.memory_space<vmem>>, vector<1x128xf32>
    %20 = vector.broadcast %19 : vector<1x128xf32> to vector<8x128xf32>
    %21 = arith.addf %18, %20 : vector<8x128xf32>
    %cst_11 = arith.constant 0.000000e+00 : f32
    %22 = vector.broadcast %cst_11 : f32 to vector<8x128xf32>
    %23 = arith.maximumf %21, %22 : vector<8x128xf32>
    %c0_12 = arith.constant 0 : index
    %c0_13 = arith.constant 0 : index
    %24 = vector.load %arg6[%c0_12, %c0_13] : memref<2x128xf32, #tpu.memory_space<vmem>>, vector<1x128xf32>
    %25 = vector.broadcast %24 : vector<1x128xf32> to vector<8x128xf32>
    %26 = arith.mulf %23, %25 : vector<8x128xf32>
    %cst_14 = arith.constant dense<0.000000e+00> : vector<8xf32>
    %27 = vector.multi_reduction <add>, %26, %cst_14 [1] : vector<8x128xf32> to vector<8xf32>
    %28 = vector.shape_cast %27 : vector<8xf32> to vector<8x1xf32>
    %c1_15 = arith.constant 1 : index
    %c0_16 = arith.constant 0 : index
    %29 = vector.load %arg6[%c1_15, %c0_16] : memref<2x128xf32, #tpu.memory_space<vmem>>, vector<1x128xf32>
    %30 = vector.broadcast %29 : vector<1x128xf32> to vector<8x128xf32>
    %31 = arith.mulf %23, %30 : vector<8x128xf32>
    %cst_17 = arith.constant dense<0.000000e+00> : vector<8xf32>
    %32 = vector.multi_reduction <add>, %31, %cst_17 [1] : vector<8x128xf32> to vector<8xf32>
    %33 = vector.shape_cast %32 : vector<8xf32> to vector<8x1xf32>
    %34 = tpu.concatenate %28, %33 in 1 : vector<8x1xf32>, vector<8x1xf32> -> vector<8x2xf32>
    %c0_18 = arith.constant 0 : index
    %c0_19 = arith.constant 0 : index
    %35 = vector.load %arg7[%c0_18, %c0_19] : memref<1x2xf32, #tpu.memory_space<vmem>>, vector<1x2xf32>
    %36 = vector.broadcast %35 : vector<1x2xf32> to vector<8x2xf32>
    %37 = arith.addf %34, %36 : vector<8x2xf32>
    %c0_20 = arith.constant 0 : index
    %c0_21 = arith.constant 0 : index
    %38 = vector.load %arg8[%c0_20, %c0_21] : memref<8x2xf32, #tpu.memory_space<vmem>>, vector<8x2xf32>
    tpu.vector_store %arg8[%c0_20, %c0_21], %37 {strides = array<i32>} : memref<8x2xf32, #tpu.memory_space<vmem>>, vector<8x2xf32>,
    return
  }
  func.func @transform_0(%arg0: i32) -> (i32, i32) {
    %c0_i32 = arith.constant 0 : i32
    %c0_i32_0 = arith.constant 0 : i32
    return %arg0, %c0_i32 : i32, i32
  }
  func.func @transform_1(%arg0: i32) -> (i32, i32) {
    %c0_i32 = arith.constant 0 : i32
    %c0_i32_0 = arith.constant 0 : i32
    %c0_i32_1 = arith.constant 0 : i32
    return %c0_i32, %c0_i32_0 : i32, i32
  }
  func.func @transform_2(%arg0: i32) -> (i32, i32) {
    %c0_i32 = arith.constant 0 : i32
    %c0_i32_0 = arith.constant 0 : i32
    %c0_i32_1 = arith.constant 0 : i32
    return %c0_i32, %c0_i32_0 : i32, i32
  }
  func.func @transform_3(%arg0: i32) -> (i32, i32) {
    %c0_i32 = arith.constant 0 : i32
    %c0_i32_0 = arith.constant 0 : i32
    %c0_i32_1 = arith.constant 0 : i32
    return %c0_i32, %c0_i32_0 : i32, i32
  }
  func.func @transform_4(%arg0: i32) -> (i32, i32) {
    %c0_i32 = arith.constant 0 : i32
    %c0_i32_0 = arith.constant 0 : i32
    %c0_i32_1 = arith.constant 0 : i32
    return %c0_i32, %c0_i32_0 : i32, i32
  }
  func.func @transform_5(%arg0: i32) -> (i32, i32) {
    %c0_i32 = arith.constant 0 : i32
    %c0_i32_0 = arith.constant 0 : i32
    %c0_i32_1 = arith.constant 0 : i32
    return %c0_i32, %c0_i32_0 : i32, i32
  }
  func.func @transform_6(%arg0: i32) -> (i32, i32) {
    %c0_i32 = arith.constant 0 : i32
    %c0_i32_0 = arith.constant 0 : i32
    %c0_i32_1 = arith.constant 0 : i32
    return %c0_i32, %c0_i32_0 : i32, i32
  }
  func.func @transform_7(%arg0: i32) -> (i32, i32) {
    %c0_i32 = arith.constant 0 : i32
    %c0_i32_0 = arith.constant 0 : i32
    return %arg0, %c0_i32 : i32, i32
  }
}

</mosaic_0001>

<llo_original>
// kernel: generator_forward.1
$region0: #{generator_forward.1}
  #allocation0 [shape = 'u32[]', space=smem, size = 0x4, offset = 0x4, fixed_abs, tag = 'smem constant byte address 0x4 - core index']
  #allocation1 [shape = 'u32[144,128]{1,0:T(1,128)}', space=vmem, size = 0x12000, scoped, tag = 'internal scratch']
  %s0 = inlined_call_operand.vmem [shape: f32[8,2], index: 0, kind: input, shape index: {}]
  %s1 = inlined_call_operand.vmem [shape: f32[2,256], index: 1, kind: input, shape index: {}]
  %s2 = inlined_call_operand.vmem [shape: f32[1,256], index: 2, kind: input, shape index: {}]
  %s3 = inlined_call_operand.hbm [shape: f32[256,128], index: 3, kind: input, shape index: {}]
  %s4 = inlined_call_operand.vmem [shape: f32[1,128], index: 4, kind: input, shape index: {}]
  %s5 = inlined_call_operand.vmem [shape: f32[2,128], index: 5, kind: input, shape index: {}]
  %s6 = inlined_call_operand.vmem [shape: f32[1,2], index: 6, kind: input, shape index: {}]
  %s7 = inlined_call_operand.vmem [shape: f32[8,2], index: 7, kind: output, shape index: {}]
  %s8 = sld [smem:[#allocation0]]
  $region42: #{generator_forward.1} parent=0
    _
  %s10 = ssub.s32 1, %s8
  %s11 = scalar_select 0, %s10, %s8
  $region1: #{generator_forward.1} parent=0
    #allocation2 [shape = 'u8[131072]{0}', space=vmem, size = 0x20000, scoped, tag = 'input window, operand 3, single buffered']
    #allocation3 [shape = 's32[1]{0}', space=sflag, size = 0x4, scoped, tag = 'scoped memory for generator_forward.1']
    %12 = vsyncpa [#allocation3], 0
    // Predicated region
    $region2: #{generator_forward.1} parent=1 // pred_check
      _
    $region3: #{generator_forward.1} parent=1 // pred_check_branch
      %14 = sbr.rel (0) target = $region5
    $region4: #{generator_forward.1} parent=1 // pred_region
      _
    $region5: #{generator_forward.1} parent=1 // pred_fallthru
      _
    // Predicated region
    $region6: #{generator_forward.1} parent=1 // pred_check
      _
    $region7: #{generator_forward.1} parent=1 // pred_check_branch
      %16 = sbr.rel (0) target = $region9
    $region8: #{generator_forward.1} parent=1 // pred_region
      _
    $region9: #{generator_forward.1} parent=1 // pred_fallthru
      _
    // Predicated region
    $region10: #{generator_forward.1} parent=1 // pred_check
      _
    $region11: #{generator_forward.1} parent=1 // pred_check_branch
      %18 = sbr.rel (0) target = $region13
    $region12: #{generator_forward.1} parent=1 // pred_region
      _
    $region13: #{generator_forward.1} parent=1 // pred_fallthru
      _
    // Predicated region
    $region14: #{generator_forward.1} parent=1 // pred_check
      _
    $region15: #{generator_forward.1} parent=1 // pred_check_branch
      %20 = sbr.rel (0) target = $region17
    $region16: #{generator_forward.1} parent=1 // pred_region
      %s22 = ssub.s32 4096, 4096
      %23 = vsyncadd [#allocation3], %s22
      %s24 = sshll.u32 [#allocation2], 4
      %s25 = int_to_ptr.vmem [resolvable:$true] %s24
      %30 = dma.hbm_to_vmem [thread:$0]  %s3, 4096, %s25, [#allocation3], 128, 128, 8
    $region17: #{generator_forward.1} parent=1 // pred_fallthru
      _
    // Predicated region
    $region18: #{generator_forward.1} parent=1 // pred_check
      _
    $region19: #{generator_forward.1} parent=1 // pred_check_branch
      %32 = sbr.rel (0) target = $region21
    $region20: #{generator_forward.1} parent=1 // pred_region
      _
    $region21: #{generator_forward.1} parent=1 // pred_fallthru
      _
    // Predicated region
    $region22: #{generator_forward.1} parent=1 // pred_check
      _
    $region23: #{generator_forward.1} parent=1 // pred_check_branch
      %34 = sbr.rel (0) target = $region25
    $region24: #{generator_forward.1} parent=1 // pred_region
      _
    $region25: #{generator_forward.1} parent=1 // pred_fallthru
      _
    // Predicated region
    $region26: #{generator_forward.1} parent=1 // pred_check
      _
    $region27: #{generator_forward.1} parent=1 // pred_check_branch
      %36 = sbr.rel (0) target = $region29
    $region28: #{generator_forward.1} parent=1 // pred_region
      _
    $region29: #{generator_forward.1} parent=1 // pred_fallthru
      _
    // Predicated region
    $region30: #{generator_forward.1} parent=1 // pred_check
      _
    $region31: #{generator_forward.1} parent=1 // pred_check_branch
      %38 = sbr.rel (0) target = $region33
    $region32: #{generator_forward.1} parent=1 // pred_region
      %39 = dma.done [#allocation3], 4096
    $region33: #{generator_forward.1} parent=1 // pred_fallthru
      _
    %v40 = vld [vmem:[%s0] sm:$0xff]
    %v41 = vld [vmem:[%s1] ss:$2 sm:$0x3]
    %43 = vset.pattern.permute.xlu0 0
    %44 = vperm.xlu0 %43, %v40
    %v45 = vpop.permute.xlu0 %44
    %v48 = vlaneseq
    %v49 = vshrl.u32 %v48, 7
    %v50 = vsub.s32 0, %v49
    %v51 = vrot.slane %v41, %v50
    %v52 = vlaneseq
    %v53 = vshrl.u32 %v52, 7
    %v54 = vsub.s32 1, %v53
    %v55 = vrot.slane %v41, %v54
    %v58 = vmul.f32 %v45, %v51
    %v59 = vmul.f32 %v45, %v55
    %s60 = scalar_lea.vmem %s1, 1
    %v61 = vld [vmem:[%s60] ss:$2 sm:$0x3]
    %62 = vset.pattern.permute.xlu0 1
    %63 = vperm.xlu0 %62, %v40
    %v64 = vpop.permute.xlu0 %63
    %v67 = vlaneseq
    %v68 = vshrl.u32 %v67, 7
    %v69 = vsub.s32 0, %v68
    %v70 = vrot.slane %v61, %v69
    %v71 = vlaneseq
    %v72 = vshrl.u32 %v71, 7
    %v73 = vsub.s32 1, %v72
    %v74 = vrot.slane %v61, %v73
    %v77 = vmul.f32 %v64, %v70
    %v78 = vmul.f32 %v64, %v74
    %v79 = vadd.f32 %v58, %v77
    %v80 = vadd.f32 %v59, %v78
    %v81 = vld [vmem:[%s2] sm:$0x3]
    %v83 = vlaneseq
    %v84 = vshrl.u32 %v83, 7
    %v85 = vsub.s32 0, %v84
    %v86 = vrot.slane %v81, %v85
    %v87 = vlaneseq
    %v88 = vshrl.u32 %v87, 7
    %v89 = vsub.s32 1, %v88
    %v90 = vrot.slane %v81, %v89
    %v93 = vadd.f32 %v79, %v86
    %v94 = vadd.f32 %v80, %v90
    %v95 = vmax.f32 %v93, 0.0
    %v96 = vmax.f32 %v94, 0.0
    %v97 = vld [vmem:[#allocation2] sm:$0xff]
    %v98 = vld [vmem:[#allocation2 + $0x8] sm:$0xff]
    %v99 = vld [vmem:[#allocation2 + $0x10] sm:$0xff]
    %v100 = vld [vmem:[#allocation2 + $0x18] sm:$0xff]
    %v101 = vld [vmem:[#allocation2 + $0x20] sm:$0xff]
    %v102 = vld [vmem:[#allocation2 + $0x28] sm:$0xff]
    %v103 = vld [vmem:[#allocation2 + $0x30] sm:$0xff]
    %v104 = vld [vmem:[#allocation2 + $0x38] sm:$0xff]
    %v105 = vld [vmem:[#allocation2 + $0x40] sm:$0xff]
    %v106 = vld [vmem:[#allocation2 + $0x48] sm:$0xff]
    %v107 = vld [vmem:[#allocation2 + $0x50] sm:$0xff]
    %v108 = vld [vmem:[#allocation2 + $0x58] sm:$0xff]
    %v109 = vld [vmem:[#allocation2 + $0x60] sm:$0xff]
    %v110 = vld [vmem:[#allocation2 + $0x68] sm:$0xff]
    %v111 = vld [vmem:[#allocation2 + $0x70] sm:$0xff]
    %v112 = vld [vmem:[#allocation2 + $0x78] sm:$0xff]
    %v113 = vld [vmem:[#allocation2 + $0x80] sm:$0xff]
    %v114 = vld [vmem:[#allocation2 + $0x88] sm:$0xff]
    %v115 = vld [vmem:[#allocation2 + $0x90] sm:$0xff]
    %v116 = vld [vmem:[#allocation2 + $0x98] sm:$0xff]
    %v117 = vld [vmem:[#allocation2 + $0xa0] sm:$0xff]
    %v118 = vld [vmem:[#allocation2 + $0xa8] sm:$0xff]
    %v119 = vld [vmem:[#allocation2 + $0xb0] sm:$0xff]
    %v120 = vld [vmem:[#allocation2 + $0xb8] sm:$0xff]
    %v121 = vld [vmem:[#allocation2 + $0xc0] sm:$0xff]
    %v122 = vld [vmem:[#allocation2 + $0xc8] sm:$0xff]
    %v123 = vld [vmem:[#allocation2 + $0xd0] sm:$0xff]
    %v124 = vld [vmem:[#allocation2 + $0xd8] sm:$0xff]
    %v125 = vld [vmem:[#allocation2 + $0xe0] sm:$0xff]
    %v126 = vld [vmem:[#allocation2 + $0xe8] sm:$0xff]
    %v127 = vld [vmem:[#allocation2 + $0xf0] sm:$0xff]
    %v128 = vld [vmem:[#allocation2 + $0xf8] sm:$0xff]
    %v129 = vld [vmem:[%s4] sm:$0x1]
    %v131 = vlaneseq
    %v132 = vshrl.u32 %v131, 7
    %v133 = vsub.s32 0, %v132
    %v134 = vrot.slane %v129, %v133
    %136 = vmatprep.subr.mxu0 0.0
    %137 = vmatpush1.msra.mxu0 %v97
    %138 = vmatprep.subr.mxu0 0.0
    %139 = vmatpush1.msra.mxu0 %v98
    %140 = vmatprep.subr.mxu0 0.0
    %141 = vmatpush1.msra.mxu0 %v99
    %142 = vmatprep.subr.mxu0 0.0
    %143 = vmatpush1.msra.mxu0 %v100
    %144 = vmatprep.subr.mxu0 0.0
    %145 = vmatpush1.msra.mxu0 %v101
    %146 = vmatprep.subr.mxu0 0.0
    %147 = vmatpush1.msra.mxu0 %v102
    %148 = vmatprep.subr.mxu0 0.0
    %149 = vmatpush1.msra.mxu0 %v103
    %150 = vmatprep.subr.mxu0 0.0
    %151 = vmatpush1.msra.mxu0 %v104
    %152 = vmatprep.subr.mxu0 0.0
    %153 = vmatpush1.msra.mxu0 %v105
    %154 = vmatprep.subr.mxu0 0.0
    %155 = vmatpush1.msra.mxu0 %v106
    %156 = vmatprep.subr.mxu0 0.0
    %157 = vmatpush1.msra.mxu0 %v107
    %158 = vmatprep.subr.mxu0 0.0
    %159 = vmatpush1.msra.mxu0 %v108
    %160 = vmatprep.subr.mxu0 0.0
    %161 = vmatpush1.msra.mxu0 %v109
    %162 = vmatprep.subr.mxu0 0.0
    %163 = vmatpush1.msra.mxu0 %v110
    %164 = vmatprep.subr.mxu0 0.0
    %165 = vmatpush1.msra.mxu0 %v111
    %166 = vmatprep.subr.mxu0 0.0
    %167 = vmatpush1.msra.mxu0 %v112
    %168 = vmatprep.subr.mxu0 0.0
    %169 = vmatpush1.msra.mxu0 %v113
    %170 = vmatprep.subr.mxu0 0.0
    %171 = vmatpush1.msra.mxu0 %v114
    %172 = vmatprep.subr.mxu0 0.0
    %173 = vmatpush1.msra.mxu0 %v115
    %174 = vmatprep.subr.mxu0 0.0
    %175 = vmatpush1.msra.mxu0 %v116
    %176 = vmatprep.subr.mxu0 0.0
    %177 = vmatpush1.msra.mxu0 %v117
    %178 = vmatprep.subr.mxu0 0.0
    %179 = vmatpush1.msra.mxu0 %v118
    %180 = vmatprep.subr.mxu0 0.0
    %181 = vmatpush1.msra.mxu0 %v119
    %182 = vmatprep.subr.mxu0 0.0
    %183 = vmatpush1.msra.mxu0 %v120
    %184 = vmatprep.subr.mxu0 0.0
    %185 = vmatpush1.msra.mxu0 %v121
    %186 = vmatprep.subr.mxu0 0.0
    %187 = vmatpush1.msra.mxu0 %v122
    %188 = vmatprep.subr.mxu0 0.0
    %189 = vmatpush1.msra.mxu0 %v123
    %190 = vmatprep.subr.mxu0 0.0
    %191 = vmatpush1.msra.mxu0 %v124
    %192 = vmatprep.subr.mxu0 0.0
    %193 = vmatpush1.msra.mxu0 %v125
    %194 = vmatprep.subr.mxu0 0.0
    %195 = vmatpush1.msra.mxu0 %v126
    %196 = vmatprep.subr.mxu0 0.0
    %197 = vmatpush1.msra.mxu0 %v127
    %198 = vmatprep.subr.mxu0 0.0
    %199 = vmatpush1.msra.mxu0 %v128
    %200 = vmatprep.mubr.f32.mxu0 %v96
    %201 = vmatmul.mubr.f32.gmra.mrb[0].mxu0 %v95
    %v202 = vpop.f32.mrb[0].mxu0
    %v203 = vadd.f32 %v134, %v202
    %v204 = vpop.f32.mrb[0].mxu0
    %205 = vdwg.mxu0
    %v206 = vmax.f32 %v203, 0.0
    %v207 = vld [vmem:[%s5] sm:$0x1]
    %v208 = vlaneseq
    %v209 = vshrl.u32 %v208, 7
    %v210 = vsub.s32 0, %v209
    %v211 = vrot.slane %v207, %v210
    %v212 = vmul.f32 %v206, %v211
    %213 = vadd.xlane.f32.xlu0 %v212
    %v214 = vpop.xlane.xlu0 %213
    %v215 = vld [vmem:[%s5 + $0x1] sm:$0x1]
    %v216 = vlaneseq
    %v217 = vshrl.u32 %v216, 7
    %v218 = vsub.s32 0, %v217
    %v219 = vrot.slane %v215, %v218
    %v220 = vmul.f32 %v206, %v219
    %221 = vadd.xlane.f32.xlu0 %v220
    %v222 = vpop.xlane.xlu0 %221
    %vm223 = vcmask 7168
    %v224 = vsel %vm223, %v214, %v222
    %v225 = vld [vmem:[%s6] sm:$0x1]
    %v227 = vlaneseq
    %v228 = vshrl.u32 %v227, 7
    %v229 = vsub.s32 0, %v228
    %v230 = vrot.slane %v225, %v229
    %v232 = vadd.f32 %v224, %v230
    %vm233 = vcmask 15360
    %234 = vst.msk [vmem:[%s7] sm:$0xff] %vm233, %v232
    // Predicated region
    $region34: #{generator_forward.1} parent=1 // pred_check
      _
    $region35: #{generator_forward.1} parent=1 // pred_check_branch
      %236 = sbr.rel (0) target = $region37
    $region36: #{generator_forward.1} parent=1 // pred_region
      _
    $region37: #{generator_forward.1} parent=1 // pred_fallthru
      _
    // Predicated region
    $region38: #{generator_forward.1} parent=1 // pred_check
      _
    $region39: #{generator_forward.1} parent=1 // pred_check_branch
      %238 = sbr.rel (0) target = $region41
    $region40: #{generator_forward.1} parent=1 // pred_region
      _
    $region41: #{generator_forward.1} parent=1 // pred_fallthru
      _
    %239 = vsyncpa [#allocation3], 1

</llo_original>
